<compile_context>
chip_gen: v5e
topology: v5e:2x2
jax: 0.10.0
libtpu: 0.0.40
codegen_flags: <defaults>
</compile_context>

<pallas_src>
import functools

import jax
import jax.numpy as jnp
from jax import lax
from jax.experimental import pallas as pl
from jax.experimental.pallas import tpu as pltpu


# ----------------------------- helpers --------------------------------------

def _lane_tree_sum(v):
    """[E, W] -> [E, 128] pairwise (log-depth) sum of 128-lane groups."""
    n = v.shape[1] // 128
    parts = [v[:, k * 128:(k + 1) * 128] for k in range(n)]
    while len(parts) > 1:
        nxt = [parts[k] + parts[k + 1] for k in range(0, len(parts) - 1, 2)]
        if len(parts) % 2:
            nxt.append(parts[-1])
        parts = nxt
    return parts[0]


def _choose_inner(tile):
    """Largest 128-multiple <= 1024 that divides the grid tile."""
    for cand in (1024, 512, 256, 128):
        if tile % cand == 0:
            return cand
    return 128  # unreachable: tile is always a multiple of 128


# ----------------------------- Pallas kernel --------------------------------

def _router_stats_kernel(logits_ref, w_ref, count_out_ref, prob_out_ref, *,
                         num_experts: int, top_k: int, inner: int,
                         n_inner: int):
    i = pl.program_id(2)  # token-block index within this (layer, chunk)

    @pl.when(i == 0)
    def _init():
        count_out_ref[...] = jnp.zeros_like(count_out_ref)
        prob_out_ref[...] = jnp.zeros_like(prob_out_ref)

    # Hoisted: broadcast_in_dim is not CSE'd by JAX, so build iota once.
    iota_e = lax.broadcasted_iota(jnp.int32, (num_experts, inner), 0)

    # Static unrolled sub-chunk loop: keeps the live set at [E, inner] width
    # while the BlockSpec tile stays large enough to amortize per-step
    # pipeline overhead.  All slices below are static, 128-aligned lane
    # slices (free vreg views).
    for j in range(n_inner):
        lo = j * inner
        x = logits_ref[:, lo:lo + inner].astype(jnp.float32)   # [E, inner]
        w = w_ref[:, lo:lo + inner]                             # [1, inner] f32

        # --- stable softmax over experts (sublane axis); the token weight is
        #     folded into the per-token scale so only one narrow multiply ---
        m = jnp.max(x, axis=0, keepdims=True)
        ex = jnp.exp(x - m)
        denom = jnp.sum(ex, axis=0, keepdims=True)
        scale = w * pl.reciprocal(denom, approx=False)          # [1, inner]
        prob_out_ref[...] += _lane_tree_sum(ex * scale)

        # --- top-k selection (lowest expert index wins exact ties, matching
        #     lax.top_k); token weight folded directly into the select ---
        w_b = jnp.broadcast_to(w, (num_experts, inner))
        cur = x
        wc = None
        for kk in range(top_k):
            cur_max = jnp.max(cur, axis=0, keepdims=True)
            is_max = cur == cur_max
            first = jnp.min(jnp.where(is_max, iota_e, num_experts),
                            axis=0, keepdims=True)
            sel = iota_e == first
            contrib = jnp.where(sel, w_b, 0.0)
            wc = contrib if wc is None else wc + contrib
            if kk < top_k - 1:
                cur = jnp.where(sel, -jnp.inf, cur)
        count_out_ref[...] += _lane_tree_sum(wc)


# ------------------------------- wrapper -------------------------------------

def _mixtral_router_stats(stacked_logits, token_weights, top_k: int,
                          tile_t: int = 8192, n_chunks_hint: int = 2):
    """stacked_logits: [L, E, BS] (source dtype), token_weights: [BS] f32.

    Returns lane-resident weighted partials (top-k counts, routing probs),
    each shaped [L, n_chunks, E, 128]; reduce over (0, 1, 3) in XLA."""
    num_layers, num_experts, bs = stacked_logits.shape

    tile_t = max(128, (tile_t // 128) * 128)
    bs128 = pl.cdiv(bs, 128) * 128
    tile = min(tile_t, bs128)                    # grid token-block (mult of 128)
    inner = _choose_inner(tile)                  # in-register sub-chunk width
    n_inner = tile // inner

    total_blocks = pl.cdiv(bs, tile)
    n_chunks = n_chunks_hint if total_blocks >= n_chunks_hint else 1
    bpc = pl.cdiv(total_blocks, n_chunks)        # token blocks per chunk
    bs_pad = n_chunks * bpc * tile
    if bs_pad != bs:                             # padded tokens carry weight 0
        stacked_logits = jnp.pad(stacked_logits,
                                 ((0, 0), (0, 0), (0, bs_pad - bs)))
        token_weights = jnp.pad(token_weights, ((0, bs_pad - bs),))
    w_row = token_weights.reshape(1, bs_pad).astype(jnp.float32)

    kernel = functools.partial(_router_stats_kernel, num_experts=num_experts,
                               top_k=top_k, inner=inner, n_inner=n_inner)

    # Explicit VMEM budget: double-buffered logits + weight blocks + outputs,
    # plus generous headroom; keeps us far under v7x's scoped ceiling.
    itemsize = jnp.dtype(stacked_logits.dtype).itemsize
    vmem_need = (2 * num_experts * tile * itemsize
                 + 2 * tile * 4
                 + 2 * 2 * num_experts * 128 * 4)
    vmem_limit = min(int(vmem_need) + (8 << 20), 64 << 20)

    counts, probs = pl.pallas_call(
        kernel,
        out_shape=(
            jax.ShapeDtypeStruct((num_layers, n_chunks, num_experts, 128),
                                 jnp.float32),
            jax.ShapeDtypeStruct((num_layers, n_chunks, num_experts, 128),
                                 jnp.float32),
        ),
        grid_spec=pltpu.PrefetchScalarGridSpec(
            num_scalar_prefetch=0,
            grid=(num_layers, n_chunks, bpc),
            in_specs=[
                # logits: [L, E, BS_pad] -> (E, tile) lane-dense block
                pl.BlockSpec((None, num_experts, tile),
                             lambda l, c, i: (l, 0, c * bpc + i)),
                # token weights: [1, BS_pad] -> (1, tile) block
                pl.BlockSpec((1, tile), lambda l, c, i: (0, c * bpc + i)),
            ],
            out_specs=(
                pl.BlockSpec((None, None, num_experts, 128),
                             lambda l, c, i: (l, c, 0, 0)),
                pl.BlockSpec((None, None, num_experts, 128),
                             lambda l, c, i: (l, c, 0, 0)),
            ),
        ),
        compiler_params=pltpu.CompilerParams(
            dimension_semantics=("parallel", "parallel", "arbitrary"),
            vmem_limit_bytes=vmem_limit),
    )(stacked_logits, w_row)
    return counts, probs


# --------------------------- module equivalent --------------------------------

class MixtralRouterLossPallas:
    """JAX/Pallas equivalent of mlora MixtralRouterLoss.forward."""

    def __init__(self, aux_loss_coef: float, num_experts: int, top_k: int):
        self.aux_loss_coef = aux_loss_coef
        self.experts = num_experts
        self.topk = top_k

    def __call__(self, gate_logits, attention_mask=None, tile_t: int = 8192):
        # gate_logits: list of [batch*seq, num_experts] arrays (one per layer),
        # or an already-stacked [num_layers, batch*seq, num_experts] array.
        # Source dtype (e.g. bf16) is preserved through HBM; cast happens
        # in-kernel.
        if isinstance(gate_logits, (list, tuple)):
            stacked = jnp.stack([jnp.transpose(g) for g in gate_logits], axis=0)
        else:
            stacked = jnp.swapaxes(gate_logits, 1, 2)       # [L, BS, E] -> [L, E, BS]
        num_layers, num_experts, bs = stacked.shape
        assert num_experts == self.experts

        if attention_mask is None:
            weights = jnp.ones((bs,), jnp.float32)
        else:
            weights = attention_mask.reshape(-1).astype(jnp.float32)

        counts, probs = _mixtral_router_stats(stacked, weights, self.topk,
                                              tile_t=tile_t)

        # Tiny combine + normalization in XLA (lane reduce + [E] dot).
        count_e = jnp.sum(counts, axis=(0, 1, 3))            # [E]
        prob_e = jnp.sum(probs, axis=(0, 1, 3))              # [E]
        total_w = jnp.float32(num_layers) * jnp.sum(weights)
        # NOTE: an all-zero mask yields 0/0 (NaN), same as the reference.
        loss = (jnp.float32(num_experts) * jnp.sum(count_e * prob_e)
                / (total_w * total_w))
        return self.aux_loss_coef * loss


# ------------------------------ reference -------------------------------------

def _reference_loss(gate_logits, num_experts, top_k, attention_mask,
                    aux_loss_coef):
    concat = jnp.concatenate([g.astype(jnp.float32) for g in gate_logits], 0)
    routing = jax.nn.softmax(concat, axis=-1)
    _, selected = lax.top_k(routing, top_k)
    expert_mask = jax.nn.one_hot(selected, num_experts)       # [T, k, E]
    if attention_mask is None:
        tokens_per_expert = jnp.mean(expert_mask, axis=0)
        router_prob_per_expert = jnp.mean(routing, axis=0)
    else:
        b, s = attention_mask.shape
        nl = concat.shape[0] // (b * s)
        eam = jnp.broadcast_to(
            attention_mask[None, :, :, None, None].astype(jnp.float32),
            (nl, b, s, top_k, num_experts)).reshape(-1, top_k, num_experts)
        tokens_per_expert = jnp.sum(expert_mask * eam, 0) / jnp.sum(eam, 0)
        ram = jnp.broadcast_to(
            attention_mask[None, :, :, None].astype(jnp.float32),
            (nl, b, s, num_experts)).reshape(-1, num_experts)
        router_prob_per_expert = jnp.sum(routing * ram, 0) / jnp.sum(ram, 0)
    overall = jnp.sum(tokens_per_expert * router_prob_per_expert[None, :])
    return aux_loss_coef * overall * num_experts


# -------------------------------- main ----------------------------------------

if __name__ == "__main__":
    aux_loss_coef = 0.001
    num_experts = 8
    top_k = 2

    module = MixtralRouterLossPallas(aux_loss_coef, num_experts, top_k)
    key = jax.random.PRNGKey(0)

    # --- Test 1: small f32 case, with and without attention mask ------------
    num_layers, batch, seq = 2, 2, 8
    keys = jax.random.split(key, num_layers + 2)
    gate_logits = [
        jax.random.normal(keys[i], (batch * seq, num_experts), jnp.float32)
        for i in range(num_layers)
    ]
    attention_mask = (jax.random.uniform(keys[num_layers], (batch, seq)) > 0.25
                      ).astype(jnp.int32)

    loss_masked = jax.block_until_ready(module(gate_logits, attention_mask))
    ref_masked = _reference_loss(gate_logits, num_experts, top_k,
                                 attention_mask, aux_loss_coef)
    assert jnp.allclose(loss_masked, ref_masked, rtol=1e-5, atol=1e-6), \
        (loss_masked, ref_masked)

    loss_nomask = jax.block_until_ready(module(gate_logits, None))
    ref_nomask = _reference_loss(gate_logits, num_experts, top_k, None,
                                 aux_loss_coef)
    assert jnp.allclose(loss_nomask, ref_nomask, rtol=1e-5, atol=1e-6), \
        (loss_nomask, ref_nomask)

    # --- Test 2: bf16 logits; exercises inner sub-chunk loop, token padding,
    #     multiple token blocks and the 2-chunk parallel axis ----------------
    num_layers2, batch2, seq2 = 3, 4, 625          # 2500 tokens -> padded 2560
    keys2 = jax.random.split(keys[num_layers + 1], num_layers2 + 1)
    gate_logits2 = [
        jax.random.normal(keys2[i], (batch2 * seq2, num_experts),
                          jnp.float32).astype(jnp.bfloat16)
        for i in range(num_layers2)
    ]
    attention_mask2 = (jax.random.uniform(keys2[-1], (batch2, seq2)) > 0.3
                       ).astype(jnp.int32)

    loss2 = jax.block_until_ready(
        module(gate_logits2, attention_mask2, tile_t=1280))
    ref2 = _reference_loss(gate_logits2, num_experts, top_k, attention_mask2,
                           aux_loss_coef)
    assert jnp.allclose(loss2, ref2, rtol=1e-4, atol=1e-6), (loss2, ref2)

    print("KERNEL_OK")
</pallas_src>

<mosaic_0001>
module attributes {stable_mosaic.version = 11 : i64} {
  func.func @_router_stats_kernel(%arg0: i32, %arg1: i32, %arg2: i32, %arg3: memref<1x8x128xf32, #tpu.memory_space<vmem>>, %arg4: memref<1x128xf32, #tpu.memory_space<vmem>>, %arg5: memref<1x1x8x128xf32, #tpu.memory_space<vmem>>, %arg6: memref<1x1x8x128xf32, #tpu.memory_space<vmem>>) attributes {dimension_semantics = [#tpu.dimension_semantics<parallel>, #tpu.dimension_semantics<parallel>, #tpu.dimension_semantics<arbitrary>], iteration_bounds = array<i64: 2, 1, 1>, scalar_prefetch = 0 : i64, scratch_operands = 0 : i64, tpu.core_type = #tpu.core_type<tc>, window_params = [{transform_indices = @transform_0, window_bounds = array<i64: 1, 8, 128>}, {transform_indices = @transform_1, window_bounds = array<i64: 1, 128>}, {transform_indices = @transform_2, window_bounds = array<i64: 1, 1, 8, 128>}, {transform_indices = @transform_3, window_bounds = array<i64: 1, 1, 8, 128>}]} {
    %c0_i32 = arith.constant 0 : i32
    %0 = arith.cmpi eq, %arg2, %c0_i32 : i32
    %1 = arith.extui %0 : i1 to i32
    %c0_i32_0 = arith.constant 0 : i32
    %2 = arith.cmpi ne, %1, %c0_i32_0 : i32
    scf.if %2 {
      %cst_30 = arith.constant 0.000000e+00 : f32
      %59 = vector.broadcast %cst_30 : f32 to vector<8x128xf32>
      %c0_31 = arith.constant 0 : index
      %c0_32 = arith.constant 0 : index
      %c0_33 = arith.constant 0 : index
      %c0_34 = arith.constant 0 : index
      %60 = vector.load %arg5[%c0_31, %c0_32, %c0_33, %c0_34] : memref<1x1x8x128xf32, #tpu.memory_space<vmem>>, vector<1x1x8x128xf32>
      %61 = vector.shape_cast %60 : vector<1x1x8x128xf32> to vector<8x128xf32>
      %62 = vector.shape_cast %59 : vector<8x128xf32> to vector<1x1x8x128xf32>
      tpu.vector_store %arg5[%c0_31, %c0_32, %c0_33, %c0_34], %62 {strides = array<i32>} : memref<1x1x8x128xf32, #tpu.memory_space<vmem>>, vector<1x1x8x128xf32>,
      %cst_35 = arith.constant 0.000000e+00 : f32
      %63 = vector.broadcast %cst_35 : f32 to vector<8x128xf32>
      %c0_36 = arith.constant 0 : index
      %c0_37 = arith.constant 0 : index
      %c0_38 = arith.constant 0 : index
      %c0_39 = arith.constant 0 : index
      %64 = vector.load %arg6[%c0_36, %c0_37, %c0_38, %c0_39] : memref<1x1x8x128xf32, #tpu.memory_space<vmem>>, vector<1x1x8x128xf32>
      %65 = vector.shape_cast %64 : vector<1x1x8x128xf32> to vector<8x128xf32>
      %66 = vector.shape_cast %63 : vector<8x128xf32> to vector<1x1x8x128xf32>
      tpu.vector_store %arg6[%c0_36, %c0_37, %c0_38, %c0_39], %66 {strides = array<i32>} : memref<1x1x8x128xf32, #tpu.memory_space<vmem>>, vector<1x1x8x128xf32>,
    } else {
    }
    %3 = tpu.iota {dimensions = array<i32: 0>} : vector<8x128xi32>
    %c0 = arith.constant 0 : index
    %c0_1 = arith.constant 0 : index
    %c0_2 = arith.constant 0 : index
    %4 = vector.load %arg3[%c0, %c0_1, %c0_2] : memref<1x8x128xf32, #tpu.memory_space<vmem>>, vector<1x8x128xf32>
    %5 = vector.shape_cast %4 : vector<1x8x128xf32> to vector<8x128xf32>
    %c0_3 = arith.constant 0 : index
    %c0_4 = arith.constant 0 : index
    %6 = vector.load %arg4[%c0_3, %c0_4] : memref<1x128xf32, #tpu.memory_space<vmem>>, vector<1x128xf32>
    %cst = arith.constant dense<0xFF800000> : vector<128xf32>
    %7 = vector.multi_reduction <maximumf>, %5, %cst [0] : vector<8x128xf32> to vector<128xf32>
    %8 = vector.shape_cast %7 : vector<128xf32> to vector<1x128xf32>
    %9 = vector.broadcast %8 : vector<1x128xf32> to vector<8x128xf32>
    %10 = arith.subf %5, %9 : vector<8x128xf32>
    %11 = math.exp %10 : vector<8x128xf32>
    %cst_5 = arith.constant dense<0.000000e+00> : vector<128xf32>
    %12 = vector.multi_reduction <add>, %11, %cst_5 [0] : vector<8x128xf32> to vector<128xf32>
    %13 = vector.shape_cast %12 : vector<128xf32> to vector<1x128xf32>
    %14 = tpu.reciprocal %13 : vector<1x128xf32> -> vector<1x128xf32>
    %15 = arith.mulf %6, %14 : vector<1x128xf32>
    %c0_6 = arith.constant 0 : index
    %c0_7 = arith.constant 0 : index
    %c0_8 = arith.constant 0 : index
    %c0_9 = arith.constant 0 : index
    %16 = vector.load %arg6[%c0_6, %c0_7, %c0_8, %c0_9] : memref<1x1x8x128xf32, #tpu.memory_space<vmem>>, vector<1x1x8x128xf32>
    %17 = vector.shape_cast %16 : vector<1x1x8x128xf32> to vector<8x128xf32>
    %18 = vector.broadcast %15 : vector<1x128xf32> to vector<8x128xf32>
    %19 = arith.mulf %11, %18 : vector<8x128xf32>
    %20 = arith.addf %17, %19 : vector<8x128xf32>
    %c0_10 = arith.constant 0 : index
    %c0_11 = arith.constant 0 : index
    %c0_12 = arith.constant 0 : index
    %c0_13 = arith.constant 0 : index
    %21 = vector.load %arg6[%c0_10, %c0_11, %c0_12, %c0_13] : memref<1x1x8x128xf32, #tpu.memory_space<vmem>>, vector<1x1x8x128xf32>
    %22 = vector.shape_cast %21 : vector<1x1x8x128xf32> to vector<8x128xf32>
    %23 = vector.shape_cast %20 : vector<8x128xf32> to vector<1x1x8x128xf32>
    tpu.vector_store %arg6[%c0_10, %c0_11, %c0_12, %c0_13], %23 {strides = array<i32>} : memref<1x1x8x128xf32, #tpu.memory_space<vmem>>, vector<1x1x8x128xf32>,
    %24 = vector.shape_cast %6 : vector<1x128xf32> to vector<1x128xf32>
    %25 = vector.broadcast %24 : vector<1x128xf32> to vector<8x128xf32>
    %cst_14 = arith.constant dense<0xFF800000> : vector<128xf32>
    %26 = vector.multi_reduction <maximumf>, %5, %cst_14 [0] : vector<8x128xf32> to vector<128xf32>
    %27 = vector.shape_cast %26 : vector<128xf32> to vector<1x128xf32>
    %28 = vector.broadcast %27 : vector<1x128xf32> to vector<8x128xf32>
    %29 = arith.cmpf oeq, %5, %28 : vector<8x128xf32>
    %c8_i32 = arith.constant 8 : i32
    %30 = vector.broadcast %c8_i32 : i32 to vector<8x128xi32>
    %31 = arith.select %29, %3, %30 : vector<8x128xi1>, vector<8x128xi32>
    %cst_15 = arith.constant dense<2147483647> : vector<128xi32>
    %32 = vector.multi_reduction <minsi>, %31, %cst_15 [0] : vector<8x128xi32> to vector<128xi32>
    %33 = vector.shape_cast %32 : vector<128xi32> to vector<1x128xi32>
    %34 = vector.broadcast %33 : vector<1x128xi32> to vector<8x128xi32>
    %35 = arith.cmpi eq, %3, %34 : vector<8x128xi32>
    %cst_16 = arith.constant 0.000000e+00 : f32
    %36 = vector.broadcast %cst_16 : f32 to vector<8x128xf32>
    %37 = arith.select %35, %25, %36 : vector<8x128xi1>, vector<8x128xf32>
    %cst_17 = arith.constant 0xFF800000 : f32
    %38 = vector.broadcast %cst_17 : f32 to vector<8x128xf32>
    %39 = arith.select %35, %38, %5 : vector<8x128xi1>, vector<8x128xf32>
    %cst_18 = arith.constant dense<0xFF800000> : vector<128xf32>
    %40 = vector.multi_reduction <maximumf>, %39, %cst_18 [0] : vector<8x128xf32> to vector<128xf32>
    %41 = vector.shape_cast %40 : vector<128xf32> to vector<1x128xf32>
    %42 = vector.broadcast %41 : vector<1x128xf32> to vector<8x128xf32>
    %43 = arith.cmpf oeq, %39, %42 : vector<8x128xf32>
    %c8_i32_19 = arith.constant 8 : i32
    %44 = vector.broadcast %c8_i32_19 : i32 to vector<8x128xi32>
    %45 = arith.select %43, %3, %44 : vector<8x128xi1>, vector<8x128xi32>
    %cst_20 = arith.constant dense<2147483647> : vector<128xi32>
    %46 = vector.multi_reduction <minsi>, %45, %cst_20 [0] : vector<8x128xi32> to vector<128xi32>
    %47 = vector.shape_cast %46 : vector<128xi32> to vector<1x128xi32>
    %48 = vector.broadcast %47 : vector<1x128xi32> to vector<8x128xi32>
    %49 = arith.cmpi eq, %3, %48 : vector<8x128xi32>
    %cst_21 = arith.constant 0.000000e+00 : f32
    %50 = vector.broadcast %cst_21 : f32 to vector<8x128xf32>
    %51 = arith.select %49, %25, %50 : vector<8x128xi1>, vector<8x128xf32>
    %52 = arith.addf %37, %51 : vector<8x128xf32>
    %c0_22 = arith.constant 0 : index
    %c0_23 = arith.constant 0 : index
    %c0_24 = arith.constant 0 : index
    %c0_25 = arith.constant 0 : index
    %53 = vector.load %arg5[%c0_22, %c0_23, %c0_24, %c0_25] : memref<1x1x8x128xf32, #tpu.memory_space<vmem>>, vector<1x1x8x128xf32>
    %54 = vector.shape_cast %53 : vector<1x1x8x128xf32> to vector<8x128xf32>
    %55 = arith.addf %54, %52 : vector<8x128xf32>
    %c0_26 = arith.constant 0 : index
    %c0_27 = arith.constant 0 : index
    %c0_28 = arith.constant 0 : index
    %c0_29 = arith.constant 0 : index
    %56 = vector.load %arg5[%c0_26, %c0_27, %c0_28, %c0_29] : memref<1x1x8x128xf32, #tpu.memory_space<vmem>>, vector<1x1x8x128xf32>
    %57 = vector.shape_cast %56 : vector<1x1x8x128xf32> to vector<8x128xf32>
    %58 = vector.shape_cast %55 : vector<8x128xf32> to vector<1x1x8x128xf32>
    tpu.vector_store %arg5[%c0_26, %c0_27, %c0_28, %c0_29], %58 {strides = array<i32>} : memref<1x1x8x128xf32, #tpu.memory_space<vmem>>, vector<1x1x8x128xf32>,
    return
  }
  func.func @transform_0(%arg0: i32, %arg1: i32, %arg2: i32) -> (i32, i32, i32) {
    %c1_i32 = arith.constant 1 : i32
    %0 = arith.muli %arg1, %c1_i32 : i32
    %1 = arith.addi %0, %arg2 : i32
    %c0_i32 = arith.constant 0 : i32
    %c0_i32_0 = arith.constant 0 : i32
    return %arg0, %c0_i32, %1 : i32, i32, i32
  }
  func.func @transform_1(%arg0: i32, %arg1: i32, %arg2: i32) -> (i32, i32) {
    %c1_i32 = arith.constant 1 : i32
    %0 = arith.muli %arg1, %c1_i32 : i32
    %1 = arith.addi %0, %arg2 : i32
    %c0_i32 = arith.constant 0 : i32
    %c0_i32_0 = arith.constant 0 : i32
    return %c0_i32, %1 : i32, i32
  }
  func.func @transform_2(%arg0: i32, %arg1: i32, %arg2: i32) -> (i32, i32, i32, i32) {
    %c0_i32 = arith.constant 0 : i32
    %c0_i32_0 = arith.constant 0 : i32
    %c0_i32_1 = arith.constant 0 : i32
    return %arg0, %arg1, %c0_i32, %c0_i32_0 : i32, i32, i32, i32
  }
  func.func @transform_3(%arg0: i32, %arg1: i32, %arg2: i32) -> (i32, i32, i32, i32) {
    %c0_i32 = arith.constant 0 : i32
    %c0_i32_0 = arith.constant 0 : i32
    %c0_i32_1 = arith.constant 0 : i32
    return %arg0, %arg1, %c0_i32, %c0_i32_0 : i32, i32, i32, i32
  }
}

</mosaic_0001>

<llo_original>
// kernel: tpu_custom_call.1
$region0: #{tpu_custom_call.1}
  #allocation0 [shape = 'u32[]', space=smem, size = 0x4, offset = 0x4, fixed_abs, tag = 'smem constant byte address 0x4 - core index']
  #allocation1 [shape = 'u32[72,128]{1,0:T(1,128)}', space=vmem, size = 0x9000, scoped, tag = 'internal scratch']
  %s0 = inlined_call_operand.hbm [shape: f32[2,8,128], index: 0, kind: input, shape index: {}]
  %s1 = inlined_call_operand.hbm [shape: f32[1,128], index: 1, kind: input, shape index: {}]
  %s2 = inlined_call_operand.hbm [shape: f32[2,1,8,128], index: 2, kind: output, shape index: {0}]
  %s3 = inlined_call_operand.hbm [shape: f32[2,1,8,128], index: 3, kind: output, shape index: {1}]
  %4 = xla_tuple %s2, %s3
  %s5 = sld [smem:[#allocation0]]
  $region61: #{tpu_custom_call.1} parent=0
    _
  %s7 = ssub.s32 1, %s5
  %s8 = scalar_select 0, %s7, %s5
  $region1: #{tpu_custom_call.1} parent=0
    #allocation2 [shape = 'u8[8192]{0}', space=vmem, size = 0x2000, scoped, tag = 'input window, operand 0']
    #allocation3 [shape = 's32[2]{0}', space=sflag, size = 0x8, scoped, tag = 'scoped memory for tpu_custom_call.1']
    #allocation4 [shape = 's32[2]{0}', space=sflag, size = 0x8, scoped, tag = 'scoped memory for tpu_custom_call.1']
    #allocation5 [shape = 'u8[512]{0}', space=vmem, size = 0x400, scoped, tag = 'input window, operand 1, single buffered']
    #allocation6 [shape = 's32[1]{0}', space=sflag, size = 0x4, scoped, tag = 'scoped memory for tpu_custom_call.1']
    #allocation7 [shape = 'u8[8192]{0}', space=vmem, size = 0x2000, scoped, tag = 'output window, operand 0']
    #allocation8 [shape = 'u8[8192]{0}', space=vmem, size = 0x2000, scoped, tag = 'output window, operand 1']
    #allocation9 [shape = 's32[2]{0}', space=sflag, size = 0x8, scoped, tag = 'scoped memory for tpu_custom_call.1']
    %9 = vsyncpa [#allocation3], 0
    %s10 = scalar_lea.sflag [#allocation3], 1
    %11 = vsyncpa %s10, 0
    %12 = vsyncpa [#allocation6], 0
    %13 = vsyncpa [#allocation4], 0
    %s14 = scalar_lea.sflag [#allocation4], 1
    %15 = vsyncpa %s14, 0
    %16 = vsyncpa [#allocation9], 0
    %s17 = scalar_lea.sflag [#allocation9], 1
    %18 = vsyncpa %s17, 0
    loop: start=0, step=1, limit=4
    $region2: #{tpu_custom_call.1} parent=1 // loop_pre_header
      _
    $region3: #{tpu_custom_call.1} parent=1 // loop_header
      %s20 = sphi 0, %s24
      %p21 = scmp.ge.s32.totalorder %s20, 4
      %s27 = sphi 0, %s46
      %s28 = sphi 0, %s42
      %s29 = sphi 0, %s38
      %s30 = sphi 0, %s27
      %s31 = sphi 0, %s28
      %s32 = sphi 0, %s29
      %s33 = sphi 0, %s30
      %s34 = sphi 0, %s31
      %s35 = sphi 0, %s32
      %s53 = sphi 0, %s55
      %s56 = sphi 0, %s53
      %s57 = sphi 0, %s56
      %s73 = sphi 0, %s57
      %s81 = sphi 0, %s83
      %s84 = sphi 0, %s81
      %s85 = sphi 0, %s84
      %s101 = sphi 0, %s85
      %s109 = sphi 0, %s111
      %s112 = sphi 0, %s109
      %s113 = sphi 0, %s112
      %s129 = sphi 0, %s113
      %s137 = sphi 0, %s139
      %s140 = sphi 0, %s137
      %s141 = sphi 0, %s140
      %s157 = sphi 0, %s141
    $region4: #{tpu_custom_call.1} parent=1 // loop_header_branch
      %23 = sbr.rel (%p21) target = $region8
    $region5: #{tpu_custom_call.1} parent=1 // loop_body
      %s25 = ssub.s32 %s20, 1
      %s26 = ssub.s32 %s20, 2
      %s36 = sadd.s32 1, %s29
      %p37 = scmp.ge.s32.totalorder %s36, 1
      %s38 = scalar_select %p37, 0, %s36
      %s39 = sadd.s32 1, %s28
      %s40 = scalar_select %p37, %s39, %s28
      %p41 = scmp.ge.s32.totalorder %s40, 1
      %s42 = scalar_select %p41, 0, %s40
      %s43 = sadd.s32 1, %s27
      %s44 = scalar_select %p41, %s43, %s27
      %p45 = scmp.ge.s32.totalorder %s44, 2
      %s46 = scalar_select %p45, 0, %s44
      %s47 = sadd.s32 %s28, %s29
      %s48 = sadd.s32 %s42, %s38
      %s49 = ssub.s32 %s27, %s46
      %s50 = ssub.s32 %s47, %s48
      %s51 = sor.u32 %s49, %s50
      %p52 = scmp.eq.s32.totalorder %s51, 0
      %s54 = sadd.s32 %s53, 1
      %s55 = scalar_select %p52, %s53, %s54
      %p58 = pneg %p52
      %p59 = scmp.eq.s32.totalorder %s20, 1
      %p60 = por %p58, %p59
      %p61 = scmp.ne.s32.totalorder %s53, %s56
      %p62 = scmp.eq.s32.totalorder %s20, 0
      %p63 = por %p61, %p62
      %p64 = scmp.ne.s32.totalorder %s53, %s56
      %p65 = scmp.eq.s32.totalorder %s25, 1
      %p66 = por %p64, %p65
      %p67 = scmp.ne.s32.totalorder %s56, %s57
      %p68 = scmp.eq.s32.totalorder %s25, 0
      %p69 = por %p67, %p68
      %p70 = scmp.ne.s32.totalorder %s56, %s57
      %p71 = scmp.eq.s32.totalorder %s26, 1
      %p72 = por %p70, %p71
      %p74 = scmp.ne.s32.totalorder %s57, %s73
      %p75 = scmp.eq.s32.totalorder %s26, 0
      %p76 = por %p74, %p75
      %s77 = sadd.s32 %s28, %s29
      %s78 = sadd.s32 %s42, %s38
      %s79 = ssub.s32 %s77, %s78
      %p80 = scmp.eq.s32.totalorder %s79, 0
      %s82 = sadd.s32 %s81, 1
      %s83 = scalar_select %p80, %s81, %s82
      %p86 = pneg %p80
      %p87 = scmp.eq.s32.totalorder %s20, 1
      %p88 = por %p86, %p87
      %p89 = scmp.ne.s32.totalorder %s81, %s84
      %p90 = scmp.eq.s32.totalorder %s20, 0
      %p91 = por %p89, %p90
      %p92 = scmp.ne.s32.totalorder %s81, %s84
      %p93 = scmp.eq.s32.totalorder %s25, 1
      %p94 = por %p92, %p93
      %p95 = scmp.ne.s32.totalorder %s84, %s85
      %p96 = scmp.eq.s32.totalorder %s25, 0
      %p97 = por %p95, %p96
      %p98 = scmp.ne.s32.totalorder %s84, %s85
      %p99 = scmp.eq.s32.totalorder %s26, 1
      %p100 = por %p98, %p99
      %p102 = scmp.ne.s32.totalorder %s85, %s101
      %p103 = scmp.eq.s32.totalorder %s26, 0
      %p104 = por %p102, %p103
      %s105 = ssub.s32 %s27, %s46
      %s106 = ssub.s32 %s28, %s42
      %s107 = sor.u32 %s105, %s106
      %p108 = scmp.eq.s32.totalorder %s107, 0
      %s110 = sadd.s32 %s109, 1
      %s111 = scalar_select %p108, %s109, %s110
      %p114 = pneg %p108
      %p115 = scmp.eq.s32.totalorder %s20, 1
      %p116 = por %p114, %p115
      %p117 = scmp.ne.s32.totalorder %s109, %s112
      %p118 = scmp.eq.s32.totalorder %s20, 0
      %p119 = por %p117, %p118
      %p120 = scmp.ne.s32.totalorder %s109, %s112
      %p121 = scmp.eq.s32.totalorder %s25, 1
      %p122 = por %p120, %p121
      %p123 = scmp.ne.s32.totalorder %s112, %s113
      %p124 = scmp.eq.s32.totalorder %s25, 0
      %p125 = por %p123, %p124
      %p126 = scmp.ne.s32.totalorder %s112, %s113
      %p127 = scmp.eq.s32.totalorder %s26, 1
      %p128 = por %p126, %p127
      %p130 = scmp.ne.s32.totalorder %s113, %s129
      %p131 = scmp.eq.s32.totalorder %s26, 0
      %p132 = por %p130, %p131
      %s133 = ssub.s32 %s27, %s46
      %s134 = ssub.s32 %s28, %s42
      %s135 = sor.u32 %s133, %s134
      %p136 = scmp.eq.s32.totalorder %s135, 0
      %s138 = sadd.s32 %s137, 1
      %s139 = scalar_select %p136, %s137, %s138
      %p142 = pneg %p136
      %p143 = scmp.eq.s32.totalorder %s20, 1
      %p144 = por %p142, %p143
      %p145 = scmp.ne.s32.totalorder %s137, %s140
      %p146 = scmp.eq.s32.totalorder %s20, 0
      %p147 = por %p145, %p146
      %p148 = scmp.ne.s32.totalorder %s137, %s140
      %p149 = scmp.eq.s32.totalorder %s25, 1
      %p150 = por %p148, %p149
      %p151 = scmp.ne.s32.totalorder %s140, %s141
      %p152 = scmp.eq.s32.totalorder %s25, 0
      %p153 = por %p151, %p152
      %p154 = scmp.ne.s32.totalorder %s140, %s141
      %p155 = scmp.eq.s32.totalorder %s26, 1
      %p156 = por %p154, %p155
      %p158 = scmp.ne.s32.totalorder %s141, %s157
      %p159 = scmp.eq.s32.totalorder %s26, 0
      %p160 = por %p158, %p159
      %p161 = scmp.le.s32.totalorder 1, %s20
      %p162 = scmp.lt.s32.totalorder %s20, 3
      %p163 = pnand %p161, %p162
      %p164 = pneg %p163
      // Predicated region
      $region9: #{tpu_custom_call.1} parent=5 // pred_check
        _
      $region10: #{tpu_custom_call.1} parent=5 // pred_check_branch
        %166 = sbr.rel (%p163) target = $region12
      $region11: #{tpu_custom_call.1} parent=5 // pred_region
        %s167 = ssub.s32 %s20, 1
        // Predicated region
        $region13: #{tpu_custom_call.1} parent=11 // pred_check
          %p168 = pneg %p97
        $region14: #{tpu_custom_call.1} parent=11 // pred_check_branch
          %170 = sbr.rel (%p168) target = $region16
        $region15: #{tpu_custom_call.1} parent=11 // pred_region
          %s171 = sadd.s32 %s31, %s32
          %173 = vsyncadd [#allocation6], 0
          %s174 = scalar_lea.hbm %s1, %s171
          %s176 = sshll.u32 %s174, 4
          %s177 = int_to_ptr.hbm [resolvable:$true] %s176
          %s178 = sshll.u32 [#allocation5], 4
          %s179 = int_to_ptr.vmem [resolvable:$true] %s178
          %181 = dma.hbm_to_vmem [thread:$0]  %s177, 16, %s179, [#allocation6]
        $region16: #{tpu_custom_call.1} parent=11 // pred_fallthru
          _
      $region12: #{tpu_custom_call.1} parent=5 // pred_fallthru
        _
      %p182 = scmp.lt.s32.totalorder %s20, 2
      // Predicated region
      $region17: #{tpu_custom_call.1} parent=5 // pred_check
        %p183 = pneg %p182
      $region18: #{tpu_custom_call.1} parent=5 // pred_check_branch
        %185 = sbr.rel (%p183) target = $region20
      $region19: #{tpu_custom_call.1} parent=5 // pred_region
        // Predicated region
        $region21: #{tpu_custom_call.1} parent=19 // pred_check
          %p186 = pneg %p63
        $region22: #{tpu_custom_call.1} parent=19 // pred_check_branch
          %188 = sbr.rel (%p186) target = $region24
        $region23: #{tpu_custom_call.1} parent=19 // pred_region
          %s189 = sand.u32 %s53, 1
          %s190 = scalar_lea.sflag [#allocation3], %s189
          %s191 = sand.u32 %s53, 1
          %s192 = smul.addr %s191, 8
          %s193 = scalar_lea.vmem [#allocation2], %s192
          %s194 = sadd.s32 %s28, %s29
          %196 = vsyncadd %s190, 0
          %s197 = sadd.s32 %s194, %s27
          %s198 = smul.addr %s197, 8
          %s199 = scalar_lea.hbm %s0, %s198
          %s201 = sshll.u32 %s199, 4
          %s202 = int_to_ptr.hbm [resolvable:$true] %s201
          %s203 = sshll.u32 %s193, 4
          %s204 = int_to_ptr.vmem [resolvable:$true] %s203
          %206 = dma.hbm_to_vmem [thread:$0]  %s202, 128, %s204, %s190
        $region24: #{tpu_custom_call.1} parent=19 // pred_fallthru
          _
      $region20: #{tpu_custom_call.1} parent=5 // pred_fallthru
        _
      %p207 = scmp.le.s32.totalorder 1, %s20
      %p208 = scmp.lt.s32.totalorder %s20, 3
      %p209 = pnand %p207, %p208
      %p210 = pneg %p209
      // Predicated region
      $region25: #{tpu_custom_call.1} parent=5 // pred_check
        _
      $region26: #{tpu_custom_call.1} parent=5 // pred_check_branch
        %212 = sbr.rel (%p209) target = $region28
      $region27: #{tpu_custom_call.1} parent=5 // pred_region
        %s213 = ssub.s32 %s20, 1
        %s214 = sand.u32 %s56, 1
        %s215 = scalar_lea.sflag [#allocation3], %s214
        %s216 = sand.u32 %s56, 1
        %s217 = smul.addr %s216, 8
        %s218 = scalar_lea.vmem [#allocation2], %s217
        // Predicated region
        $region29: #{tpu_custom_call.1} parent=27 // pred_check
          %p219 = pneg %p69
        $region30: #{tpu_custom_call.1} parent=27 // pred_check_branch
          %221 = sbr.rel (%p219) target = $region32
        $region31: #{tpu_custom_call.1} parent=27 // pred_region
          %223 = dma.done %s215, 128
        $region32: #{tpu_custom_call.1} parent=27 // pred_fallthru
          _
        // Predicated region
        $region33: #{tpu_custom_call.1} parent=27 // pred_check
          %p224 = pneg %p97
        $region34: #{tpu_custom_call.1} parent=27 // pred_check_branch
          %226 = sbr.rel (%p224) target = $region36
        $region35: #{tpu_custom_call.1} parent=27 // pred_region
          %228 = dma.done [#allocation6], 16
        $region36: #{tpu_custom_call.1} parent=27 // pred_fallthru
          _
        %s229 = sand.u32 %s56, 1
        %s230 = scalar_lea.sflag [#allocation3], %s229
        %s231 = sand.u32 %s56, 1
        %s232 = smul.addr %s231, 8
        %s233 = scalar_lea.vmem [#allocation2], %s232
        %p234 = pneg %p69
        %p235 = pneg %p66
        %p236 = pneg %p97
        %p237 = pneg %p94
        %p238 = pneg %p125
        %p239 = pneg %p122
        %s240 = sand.u32 %s112, 1
        %s241 = scalar_lea.sflag [#allocation4], %s240
        %s242 = sand.u32 %s112, 1
        %s243 = smul.addr %s242, 8
        %s244 = scalar_lea.vmem [#allocation7], %s243
        %p245 = pneg %p153
        %p246 = pneg %p150
        %s247 = sand.u32 %s140, 1
        %s248 = scalar_lea.sflag [#allocation9], %s247
        %s249 = sand.u32 %s140, 1
        %s250 = smul.addr %s249, 8
        %s251 = scalar_lea.vmem [#allocation8], %s250
        %s252 = sadd.s32 %s31, %s32
        %s253 = sadd.s32 %s31, %s32
        %p254 = scmp.eq.s32.totalorder %s32, 0
        // Predicated region
        $region37: #{tpu_custom_call.1} parent=27 // pred_check
          %p255 = pneg %p254
        $region38: #{tpu_custom_call.1} parent=27 // pred_check_branch
          %257 = sbr.rel (%p255) target = $region40
        $region39: #{tpu_custom_call.1} parent=27 // pred_region
          %258 = vst [vmem:[%s244] sm:$0xff] 0.0
          %259 = vst [vmem:[%s251] sm:$0xff] 0.0
        $region40: #{tpu_custom_call.1} parent=27 // pred_fallthru
          _
        %v260 = vlaneseq
        %v261 = vshrl.u32 %v260, 7
        %v262 = vld [vmem:[%s218] sm:$0xff]
        %v263 = vld [vmem:[#allocation5] sm:$0x1]
        %v264 = vrot.slane %v262, 4
        %v265 = vmax.f32 %v262, %v264
        %v266 = vrot.slane %v265, 2
        %v267 = vmax.f32 %v265, %v266
        %v268 = vrot.slane %v267, 1
        %v269 = vmax.f32 %v267, %v268
        %v270 = vsub.f32 %v262, %v269
        %v271 = vmul.f32 %v270, 1.442695
        %v272 = vpow.pop %v271
        %v273 = vrot.slane %v272, 4
        %v274 = vadd.f32 %v272, %v273
        %v275 = vrot.slane %v274, 2
        %v276 = vadd.f32 %v274, %v275
        %v277 = vrot.slane %v276, 1
        %v278 = vadd.f32 %v276, %v277
        %v279 = vrcp.pop %v278
        %v280 = vmul.f32 %v278, %v279
        %v281 = vsub.f32 1.0, %v280
        %v282 = vmul.f32 %v279, %v281
        %v283 = vadd.f32 %v279, %v282
        %vm284 = vweird.f32 %v278
        %vm285 = vweird.f32 %v279
        %vm286 = vmor %vm284, %vm285
        %v287 = vsel %vm286, %v279, %v283
        %v288 = vand.u32 2147483647, %v278
        %vm289 = vcmp.eq.f32.partialorder %v288, 8.507059e+37
        %v290 = vand.u32 %v278, 2147483648
        %v291 = vor.u32 1.1754944e-38, %v290
        %v292 = vsel %vm289, %v291, %v287
        %v293 = vmul.f32 %v263, %v292
        %v294 = vld [vmem:[%s251] sm:$0xff]
        %v296 = vperm.slane %v293, 0
        %v298 = vmul.f32 %v272, %v296
        %v299 = vadd.f32 %v294, %v298
        %300 = vst [vmem:[%s251] sm:$0xff] %v299
        %v302 = vperm.slane %v263, 0
        %vm304 = vcmp.eq.f32.partialorder %v262, %v269
        %v305 = vsel %vm304, %v261, 8
        %v306 = vrot.slane %v305, 4
        %vm307 = vcmp.lt.s32.totalorder %v305, %v306
        %v308 = vsel %vm307, %v305, %v306
        %v309 = vrot.slane %v308, 2
        %vm310 = vcmp.lt.s32.totalorder %v308, %v309
        %v311 = vsel %vm310, %v308, %v309
        %v312 = vrot.slane %v311, 1
        %vm313 = vcmp.lt.s32.totalorder %v311, %v312
        %v314 = vsel %vm313, %v311, %v312
        %vm315 = vcmp.eq.s32.totalorder %v261, %v314
        %v316 = vsel %vm315, %v302, 0.0
        %v317 = vsel %vm315, -inf, %v262
        %v318 = vrot.slane %v317, 4
        %v319 = vmax.f32 %v317, %v318
        %v320 = vrot.slane %v319, 2
        %v321 = vmax.f32 %v319, %v320
        %v322 = vrot.slane %v321, 1
        %v323 = vmax.f32 %v321, %v322
        %vm324 = vcmp.eq.f32.partialorder %v317, %v323
        %v325 = vsel %vm324, %v261, 8
        %v326 = vrot.slane %v325, 4
        %vm327 = vcmp.lt.s32.totalorder %v325, %v326
        %v328 = vsel %vm327, %v325, %v326
        %v329 = vrot.slane %v328, 2
        %vm330 = vcmp.lt.s32.totalorder %v328, %v329
        %v331 = vsel %vm330, %v328, %v329
        %v332 = vrot.slane %v331, 1
        %vm333 = vcmp.lt.s32.totalorder %v331, %v332
        %v334 = vsel %vm333, %v331, %v332
        %vm335 = vcmp.eq.s32.totalorder %v261, %v334
        %v336 = vsel %vm335, %v302, 0.0
        %v337 = vadd.f32 %v316, %v336
        %v338 = vld [vmem:[%s244] sm:$0xff]
        %v339 = vadd.f32 %v338, %v337
        %340 = vst [vmem:[%s244] sm:$0xff] %v339
        %s341 = sand.u32 %s112, 1
        %s342 = scalar_lea.sflag [#allocation4], %s341
        %s343 = sand.u32 %s112, 1
        %s344 = smul.addr %s343, 8
        %s345 = scalar_lea.vmem [#allocation7], %s344
        %s346 = sand.u32 %s140, 1
        %s347 = scalar_lea.sflag [#allocation9], %s346
        %s348 = sand.u32 %s140, 1
        %s349 = smul.addr %s348, 8
        %s350 = scalar_lea.vmem [#allocation8], %s349
        // Predicated region
        $region41: #{tpu_custom_call.1} parent=27 // pred_check
          %p351 = pneg %p122
        $region42: #{tpu_custom_call.1} parent=27 // pred_check_branch
          %353 = sbr.rel (%p351) target = $region44
        $region43: #{tpu_custom_call.1} parent=27 // pred_region
          %355 = vsyncadd %s342, 0
          %s356 = sadd.s32 %s31, %s30
          %s357 = smul.addr %s356, 8
          %s358 = scalar_lea.hbm %s2, %s357
          %s360 = sshll.u32 %s345, 4
          %s361 = int_to_ptr.vmem [resolvable:$true] %s360
          %s362 = sshll.u32 %s358, 4
          %s363 = int_to_ptr.hbm [resolvable:$true] %s362
          %365 = dma.vmem_to_hbm [thread:$0]  %s361, 128, %s363, %s342
        $region44: #{tpu_custom_call.1} parent=27 // pred_fallthru
          _
        // Predicated region
        $region45: #{tpu_custom_call.1} parent=27 // pred_check
          %p366 = pneg %p150
        $region46: #{tpu_custom_call.1} parent=27 // pred_check_branch
          %368 = sbr.rel (%p366) target = $region48
        $region47: #{tpu_custom_call.1} parent=27 // pred_region
          %370 = vsyncadd %s347, 0
          %s371 = sadd.s32 %s31, %s30
          %s372 = smul.addr %s371, 8
          %s373 = scalar_lea.hbm %s3, %s372
          %s375 = sshll.u32 %s350, 4
          %s376 = int_to_ptr.vmem [resolvable:$true] %s375
          %s377 = sshll.u32 %s373, 4
          %s378 = int_to_ptr.hbm [resolvable:$true] %s377
          %380 = dma.vmem_to_hbm [thread:$0]  %s376, 128, %s378, %s347
        $region48: #{tpu_custom_call.1} parent=27 // pred_fallthru
          _
      $region28: #{tpu_custom_call.1} parent=5 // pred_fallthru
        _
      %p381 = scmp.le.s32.totalorder 2, %s20
      // Predicated region
      $region49: #{tpu_custom_call.1} parent=5 // pred_check
        %p382 = pneg %p381
      $region50: #{tpu_custom_call.1} parent=5 // pred_check_branch
        %384 = sbr.rel (%p382) target = $region52
      $region51: #{tpu_custom_call.1} parent=5 // pred_region
        %s385 = ssub.s32 %s20, 2
        // Predicated region
        $region53: #{tpu_custom_call.1} parent=51 // pred_check
          %p386 = pneg %p128
        $region54: #{tpu_custom_call.1} parent=51 // pred_check_branch
          %388 = sbr.rel (%p386) target = $region56
        $region55: #{tpu_custom_call.1} parent=51 // pred_region
          %s389 = sand.u32 %s113, 1
          %s390 = scalar_lea.sflag [#allocation4], %s389
          %s391 = sand.u32 %s113, 1
          %s392 = smul.addr %s391, 8
          %s393 = scalar_lea.vmem [#allocation7], %s392
          %395 = dma.done %s390, 128
        $region56: #{tpu_custom_call.1} parent=51 // pred_fallthru
          _
        // Predicated region
        $region57: #{tpu_custom_call.1} parent=51 // pred_check
          %p396 = pneg %p156
        $region58: #{tpu_custom_call.1} parent=51 // pred_check_branch
          %398 = sbr.rel (%p396) target = $region60
        $region59: #{tpu_custom_call.1} parent=51 // pred_region
          %s399 = sand.u32 %s141, 1
          %s400 = scalar_lea.sflag [#allocation9], %s399
          %s401 = sand.u32 %s141, 1
          %s402 = smul.addr %s401, 8
          %s403 = scalar_lea.vmem [#allocation8], %s402
          %405 = dma.done %s400, 128
        $region60: #{tpu_custom_call.1} parent=51 // pred_fallthru
          _
      $region52: #{tpu_custom_call.1} parent=5 // pred_fallthru
        _
    $region6: #{tpu_custom_call.1} parent=1 // loop_footer
      %s24 = sadd.s32 1, %s20
    $region7: #{tpu_custom_call.1} parent=1 // loop_footer_branch
      %19 = sbr.rel target = $region3
    $region8: #{tpu_custom_call.1} parent=1 // loop_exit
      _
    %406 = vsyncpa [#allocation3], 1
    %s407 = scalar_lea.sflag [#allocation3], 1
    %408 = vsyncpa %s407, 1
    %409 = vsyncpa [#allocation6], 1
    %410 = vsyncpa [#allocation4], 1
    %s411 = scalar_lea.sflag [#allocation4], 1
    %412 = vsyncpa %s411, 1
    %413 = vsyncpa [#allocation9], 1
    %s414 = scalar_lea.sflag [#allocation9], 1
    %415 = vsyncpa %s414, 1

</llo_original>
